<compile_context>
chip_gen: v7x
topology: tpu7x:2x2x1
jax: 0.10.0
libtpu: 0.0.40
codegen_flags: <defaults>
</compile_context>

<pallas_src>
import functools

import jax
import jax.numpy as jnp
from jax import lax
from jax.experimental import pallas as pl
from jax.experimental.pallas import tpu as pltpu

_LANES = 128          # vreg lane width
_SUBLANES = 8         # f32 vreg sublane count
_CHUNK_ROWS = 32      # rows per inner-loop step (~32 live vregs -> no spills)
_MAX_TILE_ROWS = 2048 # 2048*128 = 262,144 px / grid step (~12 MB double-buffered)


def _round_up(x, m):
    return (x + m - 1) // m * m


def _cdiv(a, b):
    return (a + b - 1) // b


def _plan_tiling(hw, batch):
    """Pick (tile_rows, n_tiles, chunk_rows) for the pixel axis (rows of 128 px)."""
    rows = _cdiv(hw, _LANES)
    if rows > _MAX_TILE_ROWS:
        tile_rows = _MAX_TILE_ROWS
    else:
        # Keep >= 2 grid steps when batch == 1 so both v7x TensorCores get work.
        n_hint = 2 if (batch == 1 and rows >= 2 * _SUBLANES) else 1
        tile_rows = _round_up(_cdiv(rows, n_hint), _SUBLANES)
    n_tiles = _cdiv(rows, tile_rows)
    chunk_rows = _CHUNK_ROWS if tile_rows % _CHUNK_ROWS == 0 else _SUBLANES
    return tile_rows, n_tiles, chunk_rows


def _project3d_kernel(p_ref, pts_ref, out_ref, *, eps, chunk_rows):
    # p_ref:   (B, 12)             SMEM — flattened P = (K @ T)[:, :3, :] (f32)
    # pts_ref: (1, 4, R, 128)      VMEM — homogeneous points tile (input dtype)
    # out_ref: (1, 2, R, 128)      VMEM — raw pixel coords (x-plane, y-plane)
    b = pl.program_id(0)

    # Hoist the 12 projection coefficients out of the chunk loop.
    p00 = p_ref[b, 0]; p01 = p_ref[b, 1]; p02 = p_ref[b, 2];  p03 = p_ref[b, 3]
    p10 = p_ref[b, 4]; p11 = p_ref[b, 5]; p12 = p_ref[b, 6];  p13 = p_ref[b, 7]
    p20 = p_ref[b, 8]; p21 = p_ref[b, 9]; p22 = p_ref[b, 10]; p23 = p_ref[b, 11]

    n_chunks = out_ref.shape[2] // chunk_rows

    def body(i, carry):
        r0 = pl.multiple_of(i * chunk_rows, chunk_rows)
        rs = pl.ds(r0, chunk_rows)

        # Dense (chunk_rows, 128) tiles — all 8 sublanes of every vreg used.
        x = pts_ref[0, 0, rs, :].astype(jnp.float32)
        y = pts_ref[0, 1, rs, :].astype(jnp.float32)
        z = pts_ref[0, 2, rs, :].astype(jnp.float32)
        w = pts_ref[0, 3, rs, :].astype(jnp.float32)

        # 12 scalar-broadcast FMAs on the VPU (no MXU).
        cam_x = p00 * x + p01 * y + p02 * z + p03 * w
        cam_y = p10 * x + p11 * y + p12 * z + p13 * w
        cam_z = p20 * x + p21 * y + p22 * z + p23 * w

        # Exact f32 reciprocal keeps 1e-5-level agreement with the reference.
        # TODO(synk): pl.reciprocal(..., approx=True) frees VALU cycles on v7x
        # if downstream tolerance allows (~1e-4 rel error).
        inv_z = 1.0 / (cam_z + eps)

        out_ref[0, 0, rs, :] = (cam_x * inv_z).astype(out_ref.dtype)
        out_ref[0, 1, rs, :] = (cam_y * inv_z).astype(out_ref.dtype)
        return carry

    lax.fori_loop(0, n_chunks, body, 0)


@functools.partial(jax.jit, static_argnames=("height", "width", "eps"))
def project_3d_raw(points, K, T, *, height, width, eps=1e-7):
    """Pallas equivalent of Project3D_Raw.forward.

    points: (B, 4, H*W)   (any float dtype; streamed as-is, cast in-kernel)
    K, T:   (B, 4, 4)
    returns raw_pix_coords: (B, H, W, 2)
    """
    B = points.shape[0]
    HW = height * width
    assert points.shape[1] == 4 and points.shape[2] == HW, points.shape

    out_dtype = points.dtype if jnp.issubdtype(points.dtype, jnp.floating) else jnp.float32

    # Parameter glue (tiny 4x4 matmuls): P = (K @ T)[:, :3, :]  -> (B, 12) SMEM.
    P = jnp.matmul(K.astype(jnp.float32), T.astype(jnp.float32))[:, :3, :]
    P_flat = P.reshape(B, 12)

    # --- tiling: pad pixels to n_tiles * tile_rows rows of 128 lanes ----------
    tile_rows, n_tiles, chunk_rows = _plan_tiling(HW, B)
    rows_pad = tile_rows * n_tiles
    HW_pad = rows_pad * _LANES

    pts = points
    if HW_pad != HW:
        pts = jnp.pad(pts, ((0, 0), (0, 0), (0, HW_pad - HW)))
    # Free row-major view: pixel p -> (row p//128, lane p%128).
    pts = pts.reshape(B, 4, rows_pad, _LANES)

    grid = (B, n_tiles)
    out = pl.pallas_call(
        functools.partial(_project3d_kernel, eps=float(eps), chunk_rows=chunk_rows),
        out_shape=jax.ShapeDtypeStruct((B, 2, rows_pad, _LANES), out_dtype),
        grid_spec=pltpu.PrefetchScalarGridSpec(
            num_scalar_prefetch=1,                       # P_flat -> SMEM
            grid=grid,
            in_specs=[
                pl.BlockSpec((1, 4, tile_rows, _LANES), lambda b, t, p: (b, 0, t, 0)),
            ],
            out_specs=pl.BlockSpec((1, 2, tile_rows, _LANES), lambda b, t, p: (b, 0, t, 0)),
        ),
        compiler_params=pltpu.CompilerParams(
            dimension_semantics=("parallel", "parallel"),
        ),
    )(P_flat, pts)

    # Layout plumbing in XLA: (B, 2, rows_pad, 128) -> (B, H, W, 2).
    out = out.reshape(B, 2, HW_pad)
    if HW_pad != HW:
        out = out[:, :, :HW]
    return out.reshape(B, 2, height, width).transpose(0, 2, 3, 1)


def _reference(points, K, T, height, width, eps=1e-7):
    """Plain-JAX reference mirroring the PyTorch forward."""
    B = points.shape[0]
    P = jnp.matmul(K.astype(jnp.float32), T.astype(jnp.float32))[:, :3, :]
    cam = jnp.matmul(P, points.astype(jnp.float32))            # (B, 3, HW)
    pix = cam[:, :2, :] / (cam[:, 2:3, :] + eps)               # (B, 2, HW)
    return pix.reshape(B, 2, height, width).transpose(0, 2, 3, 1)


if __name__ == "__main__":
    B, H, W = 2, 16, 16
    HW = H * W

    key = jax.random.PRNGKey(0)
    k_xy, k_z, k_K, k_T = jax.random.split(key, 4)

    # Homogeneous 3D points: x,y small, z comfortably positive, w = 1.
    xy = jax.random.uniform(k_xy, (B, 2, HW), jnp.float32, -0.5, 0.5)
    zz = jax.random.uniform(k_z, (B, 1, HW), jnp.float32, 1.5, 3.0)
    points = jnp.concatenate([xy, zz, jnp.ones((B, 1, HW), jnp.float32)], axis=1)

    # Near-identity synthetic intrinsics / extrinsics (deterministic).
    K = jnp.eye(4, dtype=jnp.float32) + 0.1 * jax.random.normal(k_K, (B, 4, 4), jnp.float32)
    T = jnp.eye(4, dtype=jnp.float32) + 0.1 * jax.random.normal(k_T, (B, 4, 4), jnp.float32)

    out = project_3d_raw(points, K, T, height=H, width=W)
    out = jax.block_until_ready(out)

    ref = _reference(points, K, T, H, W)
    assert out.shape == (B, H, W, 2), out.shape
    assert jnp.allclose(out, ref, rtol=1e-5, atol=1e-5), float(
        jnp.max(jnp.abs(out - ref))
    )

    print("KERNEL_OK")
</pallas_src>

<mosaic_0001>
module attributes {stable_mosaic.version = 11 : i64} {
  func.func @_project3d_kernel(%arg0: i32, %arg1: i32, %arg2: memref<2x12xf32, #tpu.memory_space<smem>>, %arg3: memref<1x4x8x128xf32, #tpu.memory_space<vmem>>, %arg4: memref<1x2x8x128xf32, #tpu.memory_space<vmem>>) attributes {dimension_semantics = [#tpu.dimension_semantics<parallel>, #tpu.dimension_semantics<parallel>], iteration_bounds = array<i64: 2, 1>, scalar_prefetch = 1 : i64, scratch_operands = 0 : i64, tpu.core_type = #tpu.core_type<tc>, window_params = [{transform_indices = @transform_0, window_bounds = array<i64: 1, 4, 8, 128>}, {transform_indices = @transform_1, window_bounds = array<i64: 1, 2, 8, 128>}]} {
    %0 = arith.index_cast %arg0 : i32 to index
    %c0 = arith.constant 0 : index
    %1 = memref.load %arg2[%0, %c0] : memref<2x12xf32, #tpu.memory_space<smem>>
    %2 = arith.index_cast %arg0 : i32 to index
    %c1 = arith.constant 1 : index
    %3 = memref.load %arg2[%2, %c1] : memref<2x12xf32, #tpu.memory_space<smem>>
    %4 = arith.index_cast %arg0 : i32 to index
    %c2 = arith.constant 2 : index
    %5 = memref.load %arg2[%4, %c2] : memref<2x12xf32, #tpu.memory_space<smem>>
    %6 = arith.index_cast %arg0 : i32 to index
    %c3 = arith.constant 3 : index
    %7 = memref.load %arg2[%6, %c3] : memref<2x12xf32, #tpu.memory_space<smem>>
    %8 = arith.index_cast %arg0 : i32 to index
    %c4 = arith.constant 4 : index
    %9 = memref.load %arg2[%8, %c4] : memref<2x12xf32, #tpu.memory_space<smem>>
    %10 = arith.index_cast %arg0 : i32 to index
    %c5 = arith.constant 5 : index
    %11 = memref.load %arg2[%10, %c5] : memref<2x12xf32, #tpu.memory_space<smem>>
    %12 = arith.index_cast %arg0 : i32 to index
    %c6 = arith.constant 6 : index
    %13 = memref.load %arg2[%12, %c6] : memref<2x12xf32, #tpu.memory_space<smem>>
    %14 = arith.index_cast %arg0 : i32 to index
    %c7 = arith.constant 7 : index
    %15 = memref.load %arg2[%14, %c7] : memref<2x12xf32, #tpu.memory_space<smem>>
    %16 = arith.index_cast %arg0 : i32 to index
    %c8 = arith.constant 8 : index
    %17 = memref.load %arg2[%16, %c8] : memref<2x12xf32, #tpu.memory_space<smem>>
    %18 = arith.index_cast %arg0 : i32 to index
    %c9 = arith.constant 9 : index
    %19 = memref.load %arg2[%18, %c9] : memref<2x12xf32, #tpu.memory_space<smem>>
    %20 = arith.index_cast %arg0 : i32 to index
    %c10 = arith.constant 10 : index
    %21 = memref.load %arg2[%20, %c10] : memref<2x12xf32, #tpu.memory_space<smem>>
    %22 = arith.index_cast %arg0 : i32 to index
    %c11 = arith.constant 11 : index
    %23 = memref.load %arg2[%22, %c11] : memref<2x12xf32, #tpu.memory_space<smem>>
    %c0_i32 = arith.constant 0 : i32
    %c8_i32 = arith.constant 8 : i32
    %24 = arith.muli %c0_i32, %c8_i32 : i32
    %25 = tpu.assume_multiple %24, 8 : i32
    %c0_0 = arith.constant 0 : index
    %c0_1 = arith.constant 0 : index
    %26 = arith.index_cast %25 : i32 to index
    %c0_2 = arith.constant 0 : index
    %27 = vector.load %arg3[%c0_0, %c0_1, %26, %c0_2] : memref<1x4x8x128xf32, #tpu.memory_space<vmem>>, vector<1x1x8x128xf32>
    %28 = vector.shape_cast %27 : vector<1x1x8x128xf32> to vector<8x128xf32>
    %c0_3 = arith.constant 0 : index
    %c1_4 = arith.constant 1 : index
    %29 = arith.index_cast %25 : i32 to index
    %c0_5 = arith.constant 0 : index
    %30 = vector.load %arg3[%c0_3, %c1_4, %29, %c0_5] : memref<1x4x8x128xf32, #tpu.memory_space<vmem>>, vector<1x1x8x128xf32>
    %31 = vector.shape_cast %30 : vector<1x1x8x128xf32> to vector<8x128xf32>
    %c0_6 = arith.constant 0 : index
    %c2_7 = arith.constant 2 : index
    %32 = arith.index_cast %25 : i32 to index
    %c0_8 = arith.constant 0 : index
    %33 = vector.load %arg3[%c0_6, %c2_7, %32, %c0_8] : memref<1x4x8x128xf32, #tpu.memory_space<vmem>>, vector<1x1x8x128xf32>
    %34 = vector.shape_cast %33 : vector<1x1x8x128xf32> to vector<8x128xf32>
    %c0_9 = arith.constant 0 : index
    %c3_10 = arith.constant 3 : index
    %35 = arith.index_cast %25 : i32 to index
    %c0_11 = arith.constant 0 : index
    %36 = vector.load %arg3[%c0_9, %c3_10, %35, %c0_11] : memref<1x4x8x128xf32, #tpu.memory_space<vmem>>, vector<1x1x8x128xf32>
    %37 = vector.shape_cast %36 : vector<1x1x8x128xf32> to vector<8x128xf32>
    %38 = vector.broadcast %1 : f32 to vector<8x128xf32>
    %39 = arith.mulf %38, %28 : vector<8x128xf32>
    %40 = vector.broadcast %3 : f32 to vector<8x128xf32>
    %41 = arith.mulf %40, %31 : vector<8x128xf32>
    %42 = arith.addf %39, %41 : vector<8x128xf32>
    %43 = vector.broadcast %5 : f32 to vector<8x128xf32>
    %44 = arith.mulf %43, %34 : vector<8x128xf32>
    %45 = arith.addf %42, %44 : vector<8x128xf32>
    %46 = vector.broadcast %7 : f32 to vector<8x128xf32>
    %47 = arith.mulf %46, %37 : vector<8x128xf32>
    %48 = arith.addf %45, %47 : vector<8x128xf32>
    %49 = vector.broadcast %9 : f32 to vector<8x128xf32>
    %50 = arith.mulf %49, %28 : vector<8x128xf32>
    %51 = vector.broadcast %11 : f32 to vector<8x128xf32>
    %52 = arith.mulf %51, %31 : vector<8x128xf32>
    %53 = arith.addf %50, %52 : vector<8x128xf32>
    %54 = vector.broadcast %13 : f32 to vector<8x128xf32>
    %55 = arith.mulf %54, %34 : vector<8x128xf32>
    %56 = arith.addf %53, %55 : vector<8x128xf32>
    %57 = vector.broadcast %15 : f32 to vector<8x128xf32>
    %58 = arith.mulf %57, %37 : vector<8x128xf32>
    %59 = arith.addf %56, %58 : vector<8x128xf32>
    %60 = vector.broadcast %17 : f32 to vector<8x128xf32>
    %61 = arith.mulf %60, %28 : vector<8x128xf32>
    %62 = vector.broadcast %19 : f32 to vector<8x128xf32>
    %63 = arith.mulf %62, %31 : vector<8x128xf32>
    %64 = arith.addf %61, %63 : vector<8x128xf32>
    %65 = vector.broadcast %21 : f32 to vector<8x128xf32>
    %66 = arith.mulf %65, %34 : vector<8x128xf32>
    %67 = arith.addf %64, %66 : vector<8x128xf32>
    %68 = vector.broadcast %23 : f32 to vector<8x128xf32>
    %69 = arith.mulf %68, %37 : vector<8x128xf32>
    %70 = arith.addf %67, %69 : vector<8x128xf32>
    %cst = arith.constant 1.000000e-07 : f32
    %71 = vector.broadcast %cst : f32 to vector<8x128xf32>
    %72 = arith.addf %70, %71 : vector<8x128xf32>
    %cst_12 = arith.constant 1.000000e+00 : f32
    %73 = vector.broadcast %cst_12 : f32 to vector<8x128xf32>
    %74 = arith.divf %73, %72 : vector<8x128xf32>
    %75 = arith.mulf %48, %74 : vector<8x128xf32>
    %c0_13 = arith.constant 0 : index
    %c0_14 = arith.constant 0 : index
    %76 = arith.index_cast %25 : i32 to index
    %c0_15 = arith.constant 0 : index
    %77 = vector.load %arg4[%c0_13, %c0_14, %76, %c0_15] : memref<1x2x8x128xf32, #tpu.memory_space<vmem>>, vector<1x1x8x128xf32>
    %78 = vector.shape_cast %77 : vector<1x1x8x128xf32> to vector<8x128xf32>
    %79 = vector.shape_cast %75 : vector<8x128xf32> to vector<1x1x8x128xf32>
    tpu.vector_store %arg4[%c0_13, %c0_14, %76, %c0_15], %79 {strides = array<i32>} : memref<1x2x8x128xf32, #tpu.memory_space<vmem>>, vector<1x1x8x128xf32>,
    %80 = arith.mulf %59, %74 : vector<8x128xf32>
    %c0_16 = arith.constant 0 : index
    %c1_17 = arith.constant 1 : index
    %81 = arith.index_cast %25 : i32 to index
    %c0_18 = arith.constant 0 : index
    %82 = vector.load %arg4[%c0_16, %c1_17, %81, %c0_18] : memref<1x2x8x128xf32, #tpu.memory_space<vmem>>, vector<1x1x8x128xf32>
    %83 = vector.shape_cast %82 : vector<1x1x8x128xf32> to vector<8x128xf32>
    %84 = vector.shape_cast %80 : vector<8x128xf32> to vector<1x1x8x128xf32>
    tpu.vector_store %arg4[%c0_16, %c1_17, %81, %c0_18], %84 {strides = array<i32>} : memref<1x2x8x128xf32, #tpu.memory_space<vmem>>, vector<1x1x8x128xf32>,
    %c1_i32 = arith.constant 1 : i32
    return
  }
  func.func @transform_0(%arg0: i32, %arg1: i32, %arg2: memref<2x12xf32, #tpu.memory_space<smem>>) -> (i32, i32, i32, i32) {
    %c0_i32 = arith.constant 0 : i32
    %c0_i32_0 = arith.constant 0 : i32
    %c0_i32_1 = arith.constant 0 : i32
    return %arg0, %c0_i32, %arg1, %c0_i32_0 : i32, i32, i32, i32
  }
  func.func @transform_1(%arg0: i32, %arg1: i32, %arg2: memref<2x12xf32, #tpu.memory_space<smem>>) -> (i32, i32, i32, i32) {
    %c0_i32 = arith.constant 0 : i32
    %c0_i32_0 = arith.constant 0 : i32
    %c0_i32_1 = arith.constant 0 : i32
    return %arg0, %c0_i32, %arg1, %c0_i32_0 : i32, i32, i32, i32
  }
}

</mosaic_0001>

<llo_original>
// kernel: project_3d_raw.1
$region0: #{project_3d_raw.1}
  #allocation0 [shape = 'u32[]', space=smem, size = 0x4, offset = 0x4, fixed_abs, tag = 'smem constant byte address 0x4 - core index']
  #allocation1 [shape = 'u32[144,128]{1,0:T(1,128)}', space=vmem, size = 0x12000, scoped, tag = 'internal scratch']
  #allocation2 [shape = 's32[1]{0}', space=sflag, size = 0x4, scoped, tag = 'scoped memory for project_3d_raw.1']
  #allocation3 [shape = 'u8[1024]{0}', space=smem, size = 0x400, scoped, tag = 'prefetched SMEM operand 0']
  %s0 = inlined_call_operand.vmem [shape: f32[2,12], index: 0, kind: input, shape index: {}]
  %s1 = inlined_call_operand.vmem [shape: f32[2,4,8,128], index: 1, kind: input, shape index: {}]
  %s2 = inlined_call_operand.vmem [shape: f32[2,2,8,128], index: 2, kind: output, shape index: {}]
  %s3 = sld [smem:[#allocation0]]
  $region37: #{project_3d_raw.1} parent=0
    _
  %s5 = ssub.s32 1, %s3
  %s6 = scalar_select 0, %s5, %s3
  %s7 = sshll.u32 %s0, 4
  %s8 = int_to_ptr.vmem [resolvable:$true] %s7
  %10 = dma.vmem_to_smem %s8, 32, [#allocation3], [#allocation2]
  %11 = dma.done [#allocation2], 32
  %12 = sfence
  loop: start=0, step=1, limit=4
  $region2: #{project_3d_raw.1} parent=0 // loop_pre_header
    _
  $region3: #{project_3d_raw.1} parent=0 // loop_header
    %s14 = sphi 0, %s18
    %p15 = scmp.ge.s32.totalorder %s14, 4
    %s21 = sphi 0, %s33
    %s22 = sphi 0, %s29
    %s23 = sphi 0, %s21
    %s24 = sphi 0, %s22
    %s25 = sphi 0, %s23
    %s26 = sphi 0, %s24
    %s38 = sphi 0, %s40
    %s41 = sphi 0, %s38
    %s42 = sphi 0, %s41
    %s58 = sphi 0, %s42
    %s66 = sphi 0, %s68
    %s69 = sphi 0, %s66
    %s70 = sphi 0, %s69
    %s86 = sphi 0, %s70
  $region4: #{project_3d_raw.1} parent=0 // loop_header_branch
    %17 = sbr.rel (%p15) target = $region8
  $region5: #{project_3d_raw.1} parent=0 // loop_body
    %s19 = ssub.s32 %s14, 1
    %s20 = ssub.s32 %s14, 2
    %s27 = sadd.s32 1, %s22
    %p28 = scmp.ge.s32.totalorder %s27, 1
    %s29 = scalar_select %p28, 0, %s27
    %s30 = sadd.s32 1, %s21
    %s31 = scalar_select %p28, %s30, %s21
    %p32 = scmp.ge.s32.totalorder %s31, 2
    %s33 = scalar_select %p32, 0, %s31
    %s34 = ssub.s32 %s21, %s33
    %s35 = ssub.s32 %s22, %s29
    %s36 = sor.u32 %s34, %s35
    %p37 = scmp.eq.s32.totalorder %s36, 0
    %s39 = sadd.s32 %s38, 1
    %s40 = scalar_select %p37, %s38, %s39
    %p43 = pneg %p37
    %p44 = scmp.eq.s32.totalorder %s14, 1
    %p45 = por %p43, %p44
    %p46 = scmp.ne.s32.totalorder %s38, %s41
    %p47 = scmp.eq.s32.totalorder %s14, 0
    %p48 = por %p46, %p47
    %p49 = scmp.ne.s32.totalorder %s38, %s41
    %p50 = scmp.eq.s32.totalorder %s19, 1
    %p51 = por %p49, %p50
    %p52 = scmp.ne.s32.totalorder %s41, %s42
    %p53 = scmp.eq.s32.totalorder %s19, 0
    %p54 = por %p52, %p53
    %p55 = scmp.ne.s32.totalorder %s41, %s42
    %p56 = scmp.eq.s32.totalorder %s20, 1
    %p57 = por %p55, %p56
    %p59 = scmp.ne.s32.totalorder %s42, %s58
    %p60 = scmp.eq.s32.totalorder %s20, 0
    %p61 = por %p59, %p60
    %s62 = ssub.s32 %s21, %s33
    %s63 = ssub.s32 %s22, %s29
    %s64 = sor.u32 %s62, %s63
    %p65 = scmp.eq.s32.totalorder %s64, 0
    %s67 = sadd.s32 %s66, 1
    %s68 = scalar_select %p65, %s66, %s67
    %p71 = pneg %p65
    %p72 = scmp.eq.s32.totalorder %s14, 1
    %p73 = por %p71, %p72
    %p74 = scmp.ne.s32.totalorder %s66, %s69
    %p75 = scmp.eq.s32.totalorder %s14, 0
    %p76 = por %p74, %p75
    %p77 = scmp.ne.s32.totalorder %s66, %s69
    %p78 = scmp.eq.s32.totalorder %s19, 1
    %p79 = por %p77, %p78
    %p80 = scmp.ne.s32.totalorder %s69, %s70
    %p81 = scmp.eq.s32.totalorder %s19, 0
    %p82 = por %p80, %p81
    %p83 = scmp.ne.s32.totalorder %s69, %s70
    %p84 = scmp.eq.s32.totalorder %s20, 1
    %p85 = por %p83, %p84
    %p87 = scmp.ne.s32.totalorder %s70, %s86
    %p88 = scmp.eq.s32.totalorder %s20, 0
    %p89 = por %p87, %p88
    %p90 = scmp.le.s32.totalorder 1, %s14
    %p91 = scmp.lt.s32.totalorder %s14, 3
    %p92 = pnand %p90, %p91
    %p93 = pneg %p92
    // Predicated region
    $region9: #{project_3d_raw.1} parent=5 // pred_check
      _
    $region10: #{project_3d_raw.1} parent=5 // pred_check_branch
      %95 = sbr.rel (%p92) target = $region12
    $region11: #{project_3d_raw.1} parent=5 // pred_region
      %s96 = ssub.s32 %s14, 1
    $region12: #{project_3d_raw.1} parent=5 // pred_fallthru
      _
    %p97 = scmp.lt.s32.totalorder %s14, 2
    // Predicated region
    $region13: #{project_3d_raw.1} parent=5 // pred_check
      %p98 = pneg %p97
    $region14: #{project_3d_raw.1} parent=5 // pred_check_branch
      %100 = sbr.rel (%p98) target = $region16
    $region15: #{project_3d_raw.1} parent=5 // pred_region
      // Predicated region
      $region17: #{project_3d_raw.1} parent=15 // pred_check
        %p101 = pneg %p48
      $region18: #{project_3d_raw.1} parent=15 // pred_check_branch
        %103 = sbr.rel (%p101) target = $region20
      $region19: #{project_3d_raw.1} parent=15 // pred_region
        %p104 = scmp.lt.s32.totalorder %s21, 1
        %s105 = scalar_select %p104, %s21, 1
        %p106 = scmp.lt.s32.totalorder %s22, 0
        %s107 = scalar_select %p106, %s22, 0
        %s108 = smul.addr %s105, 4
        %s109 = sadd.s32 %s107, %s108
        %s110 = smul.addr %s109, 8
        %s111 = scalar_lea.vmem %s1, %s110
      $region20: #{project_3d_raw.1} parent=15 // pred_fallthru
        _
    $region16: #{project_3d_raw.1} parent=5 // pred_fallthru
      _
    %p112 = scmp.le.s32.totalorder 1, %s14
    %p113 = scmp.lt.s32.totalorder %s14, 3
    %p114 = pnand %p112, %p113
    %p115 = pneg %p114
    // Predicated region
    $region21: #{project_3d_raw.1} parent=5 // pred_check
      _
    $region22: #{project_3d_raw.1} parent=5 // pred_check_branch
      %117 = sbr.rel (%p114) target = $region24
    $region23: #{project_3d_raw.1} parent=5 // pred_region
      %s118 = ssub.s32 %s14, 1
      %p119 = scmp.lt.s32.totalorder %s23, 1
      %s120 = scalar_select %p119, %s23, 1
      %p121 = scmp.lt.s32.totalorder %s24, 0
      %s122 = scalar_select %p121, %s24, 0
      %s123 = smul.addr %s120, 4
      %s124 = sadd.s32 %s122, %s123
      %s125 = smul.addr %s124, 8
      %s126 = scalar_lea.vmem %s1, %s125
      %p127 = pneg %p54
      %p128 = pneg %p51
      %p129 = pneg %p82
      %p130 = pneg %p79
      %p131 = scmp.lt.s32.totalorder %s23, 1
      %s132 = scalar_select %p131, %s23, 1
      %p133 = scmp.lt.s32.totalorder %s24, 0
      %s134 = scalar_select %p133, %s24, 0
      %s135 = smul.addr %s132, 2
      %s136 = sadd.s32 %s134, %s135
      %s137 = smul.addr %s136, 8
      %s138 = scalar_lea.vmem %s2, %s137
      %p139 = scmp.lt.s32.totalorder %s23, 1
      %s140 = scalar_select %p139, %s23, 1
      %p141 = scmp.lt.s32.totalorder %s24, 0
      %s142 = scalar_select %p141, %s24, 0
      %s143 = smul.addr %s140, 4
      %s144 = sadd.s32 %s142, %s143
      %s145 = smul.addr %s144, 8
      %s146 = scalar_lea.vmem %s1, %s145
      %p147 = scmp.lt.s32.totalorder %s23, 1
      %s148 = scalar_select %p147, %s23, 1
      %p149 = scmp.lt.s32.totalorder %s24, 0
      %s150 = scalar_select %p149, %s24, 0
      %s151 = smul.addr %s148, 2
      %s152 = sadd.s32 %s150, %s151
      %s153 = smul.addr %s152, 8
      %s154 = scalar_lea.vmem %s2, %s153
      %s155 = smul.u32 %s23, 128
      %s156 = sld [smem:[#allocation3 + %s155]]
      %s157 = sadd.s32 %s155, 1
      %s158 = sld [smem:[#allocation3 + %s157]]
      %s159 = sadd.s32 %s155, 2
      %s160 = sld [smem:[#allocation3 + %s159]]
      %s161 = sadd.s32 %s155, 3
      %s162 = sld [smem:[#allocation3 + %s161]]
      %s163 = sadd.s32 %s155, 4
      %s164 = sld [smem:[#allocation3 + %s163]]
      %s165 = sadd.s32 %s155, 5
      %s166 = sld [smem:[#allocation3 + %s165]]
      %s167 = sadd.s32 %s155, 6
      %s168 = sld [smem:[#allocation3 + %s167]]
      %s169 = sadd.s32 %s155, 7
      %s170 = sld [smem:[#allocation3 + %s169]]
      %s171 = sadd.s32 %s155, 8
      %s172 = sld [smem:[#allocation3 + %s171]]
      %s173 = sadd.s32 %s155, 9
      %s174 = sld [smem:[#allocation3 + %s173]]
      %s175 = sadd.s32 %s155, 10
      %s176 = sld [smem:[#allocation3 + %s175]]
      %s177 = sadd.s32 %s155, 11
      %s178 = sld [smem:[#allocation3 + %s177]]
      %v179 = vld [vmem:[%s146] sm:$0xff]
      %s180 = sadd.s32 0, 8
      %s181 = scalar_lea.vmem %s146, %s180
      %v182 = vld [vmem:[%s181] sm:$0xff]
      %s183 = sadd.s32 0, 16
      %s184 = scalar_lea.vmem %s146, %s183
      %v185 = vld [vmem:[%s184] sm:$0xff]
      %s186 = sadd.s32 0, 24
      %s187 = scalar_lea.vmem %s146, %s186
      %v188 = vld [vmem:[%s187] sm:$0xff]
      %v189 = vstv %s156
      %v190 = vmul.f32 %v189, %v179
      %v191 = vstv %s158
      %v192 = vmul.f32 %v191, %v182
      %v193 = vadd.f32 %v190, %v192
      %v194 = vstv %s160
      %v195 = vmul.f32 %v194, %v185
      %v196 = vadd.f32 %v193, %v195
      %v197 = vstv %s162
      %v198 = vmul.f32 %v197, %v188
      %v199 = vadd.f32 %v196, %v198
      %v200 = vstv %s164
      %v201 = vmul.f32 %v200, %v179
      %v202 = vstv %s166
      %v203 = vmul.f32 %v202, %v182
      %v204 = vadd.f32 %v201, %v203
      %v205 = vstv %s168
      %v206 = vmul.f32 %v205, %v185
      %v207 = vadd.f32 %v204, %v206
      %v208 = vstv %s170
      %v209 = vmul.f32 %v208, %v188
      %v210 = vadd.f32 %v207, %v209
      %v211 = vstv %s172
      %v212 = vmul.f32 %v211, %v179
      %v213 = vstv %s174
      %v214 = vmul.f32 %v213, %v182
      %v215 = vadd.f32 %v212, %v214
      %v216 = vstv %s176
      %v217 = vmul.f32 %v216, %v185
      %v218 = vadd.f32 %v215, %v217
      %v219 = vstv %s178
      %v220 = vmul.f32 %v219, %v188
      %v221 = vadd.f32 %v218, %v220
      %v222 = vadd.f32 %v221, 1e-07
      %v223 = vrcp.pop %v222
      %v224 = vmul.f32 1.0, %v223
      %v225 = vmul.f32 %v199, %v224
      %226 = vst [vmem:[%s154] sm:$0xff] %v225
      %v227 = vmul.f32 %v210, %v224
      %s228 = scalar_lea.vmem %s154, %s180
      %229 = vst [vmem:[%s228] sm:$0xff] %v227
      %p230 = scmp.lt.s32.totalorder %s23, 1
      %s231 = scalar_select %p230, %s23, 1
      %p232 = scmp.lt.s32.totalorder %s24, 0
      %s233 = scalar_select %p232, %s24, 0
      %s234 = smul.addr %s231, 2
      %s235 = sadd.s32 %s233, %s234
      %s236 = smul.addr %s235, 8
      %s237 = scalar_lea.vmem %s2, %s236
      // Predicated region
      $region25: #{project_3d_raw.1} parent=23 // pred_check
        %p238 = pneg %p79
      $region26: #{project_3d_raw.1} parent=23 // pred_check_branch
        %240 = sbr.rel (%p238) target = $region28
      $region27: #{project_3d_raw.1} parent=23 // pred_region
        _
      $region28: #{project_3d_raw.1} parent=23 // pred_fallthru
        _
    $region24: #{project_3d_raw.1} parent=5 // pred_fallthru
      _
    %p241 = scmp.le.s32.totalorder 2, %s14
    // Predicated region
    $region29: #{project_3d_raw.1} parent=5 // pred_check
      %p242 = pneg %p241
    $region30: #{project_3d_raw.1} parent=5 // pred_check_branch
      %244 = sbr.rel (%p242) target = $region32
    $region31: #{project_3d_raw.1} parent=5 // pred_region
      %s245 = ssub.s32 %s14, 2
      // Predicated region
      $region33: #{project_3d_raw.1} parent=31 // pred_check
        %p246 = pneg %p85
      $region34: #{project_3d_raw.1} parent=31 // pred_check_branch
        %248 = sbr.rel (%p246) target = $region36
      $region35: #{project_3d_raw.1} parent=31 // pred_region
        %p249 = scmp.lt.s32.totalorder %s25, 1
        %s250 = scalar_select %p249, %s25, 1
        %p251 = scmp.lt.s32.totalorder %s26, 0
        %s252 = scalar_select %p251, %s26, 0
        %s253 = smul.addr %s250, 2
        %s254 = sadd.s32 %s252, %s253
        %s255 = smul.addr %s254, 8
        %s256 = scalar_lea.vmem %s2, %s255
      $region36: #{project_3d_raw.1} parent=31 // pred_fallthru
        _
    $region32: #{project_3d_raw.1} parent=5 // pred_fallthru
      _
  $region6: #{project_3d_raw.1} parent=0 // loop_footer
    %s18 = sadd.s32 1, %s14
  $region7: #{project_3d_raw.1} parent=0 // loop_footer_branch
    %13 = sbr.rel target = $region3
  $region8: #{project_3d_raw.1} parent=0 // loop_exit
    _

</llo_original>
